<compile_context>
chip_gen: v7x
topology: tpu7x:2x2x1
jax: 0.10.0
libtpu: 0.0.40
codegen_flags: <defaults>
</compile_context>

<pallas_src>
import functools
import math

import jax
import jax.numpy as jnp
from jax.experimental import pallas as pl
from jax.experimental.pallas import tpu as pltpu

_MIB = 1024 * 1024
_RESIDENT_VMEM_BUDGET = 40 * _MIB   # decide resident-vs-streamed (fits v7x 64 MiB/TC)
_VMEM_LIMIT_CAP = 48 * _MIB         # never request more than this from Mosaic


def _round_up(a, b):
    return (a + b - 1) // b * b


def _gelu_f32(h, approx):
    if approx:
        # tanh approximation: transcendental lands on the EUP slot.
        c = jnp.float32(math.sqrt(2.0 / math.pi))
        return 0.5 * h * (1.0 + jnp.tanh(c * (h + jnp.float32(0.044715) * h * h * h)))
    # Exact erf-based GELU (torch.nn.GELU() default).
    return 0.5 * h * (1.0 + jax.lax.erf(h * jnp.float32(1.0 / math.sqrt(2.0))))


# ---------------------------------------------------------------------------
# Kernels
# ---------------------------------------------------------------------------

def _ffn_resident_kernel(x_ref, w1_ref, b1_ref, w2_ref, b2_ref, o_ref, *, approx_gelu):
    """Weights fully VMEM-resident; whole hidden contraction in one pass."""
    xb = x_ref[...].astype(jnp.bfloat16)
    h = jnp.dot(xb, w1_ref[...], preferred_element_type=jnp.float32)
    h = h + b1_ref[...]
    h = _gelu_f32(h, approx_gelu)
    # Dropout(p=0.0) is identity.
    y = jnp.dot(h.astype(jnp.bfloat16), w2_ref[...], preferred_element_type=jnp.float32)
    o_ref[...] = (y + b2_ref[...]).astype(o_ref.dtype)


def _ffn_streamed_kernel(x_ref, w1_ref, b1_ref, w2_ref, b2_ref, o_ref, *,
                         block_h, approx_gelu):
    """Hidden axis streamed as an 'arbitrary' grid axis; accumulate into o_ref."""
    k = pl.program_id(1)

    xb = x_ref[...].astype(jnp.bfloat16)
    h = jnp.dot(xb, w1_ref[...], preferred_element_type=jnp.float32)

    start = pl.multiple_of(k * block_h, block_h)
    h = h + b1_ref[:, pl.ds(start, block_h)]
    h = _gelu_f32(h, approx_gelu)
    # Dropout(p=0.0) is identity.

    contrib = jnp.dot(h.astype(jnp.bfloat16), w2_ref[...],
                      preferred_element_type=jnp.float32)

    # o_ref is f32 and resident across k (its index_map ignores k): accumulate
    # directly into it, no scratch and no finalize copy.
    @pl.when(k == 0)
    def _():
        o_ref[...] = contrib

    @pl.when(k > 0)
    def _():
        o_ref[...] = o_ref[...] + contrib

    @pl.when(k == pl.num_programs(1) - 1)
    def _():
        o_ref[...] = o_ref[...] + b2_ref[...]


# ---------------------------------------------------------------------------
# Wrapper
# ---------------------------------------------------------------------------

def prepare_params(w1, b1, w2, b2):
    """One-time pad (to lane multiples of 128) + bf16 cast of the weights.

    Zero-padding is exact: padded input columns hit zero W1 rows, padded hidden
    columns get GELU(0)=0 and zero W2 rows, padded output columns are sliced off.
    """
    dim, hidden = w1.shape
    assert w2.shape == (hidden, dim)
    dim_p = _round_up(dim, 128)
    hidden_p = _round_up(hidden, 128)
    w1p = jnp.pad(w1.astype(jnp.bfloat16),
                  ((0, dim_p - dim), (0, hidden_p - hidden)))
    b1p = jnp.pad(b1.astype(jnp.float32), (0, hidden_p - hidden)).reshape(1, hidden_p)
    w2p = jnp.pad(w2.astype(jnp.bfloat16),
                  ((0, hidden_p - hidden), (0, dim_p - dim)))
    b2p = jnp.pad(b2.astype(jnp.float32), (0, dim_p - dim)).reshape(1, dim_p)
    return dict(w1=w1p, b1=b1p, w2=w2p, b2=b2p,
                dim=dim, hidden=hidden, dim_p=dim_p, hidden_p=hidden_p)


def feed_forward(x, params, *, block_m=512, block_h=512, approx_gelu=False):
    """x: (batch, seq, dim). Returns (batch, seq, dim) float32."""
    batch, seq, dim = x.shape
    assert dim == params["dim"], "x feature dim does not match prepared params"
    hidden = params["hidden"]
    dim_p, hidden_p = params["dim_p"], params["hidden_p"]
    w1p, b1p, w2p, b2p = params["w1"], params["b1"], params["w2"], params["b2"]

    m = batch * seq
    x_itemsize = jnp.dtype(x.dtype).itemsize

    # Row tile: multiple of 8 sublanes, never larger than needed.
    block_m = min(block_m, _round_up(m, 8))
    block_m = max(8, _round_up(block_m, 8))
    m_p = _round_up(m, block_m)

    # x is kept in its native dtype (cast to bf16 inside the kernel); pad only
    # when actually required so the common aligned case has no extra HBM pass.
    x2d = x.reshape(m, dim)
    if m_p != m or dim_p != dim:
        x2d = jnp.pad(x2d, ((0, m_p - m), (0, dim_p - dim)))

    num_m_tiles = m_p // block_m

    cost = pl.CostEstimate(
        flops=4 * m_p * dim_p * hidden_p,
        transcendentals=m_p * hidden_p,
        bytes_accessed=int(x2d.size * x_itemsize + w1p.size * 2 + w2p.size * 2
                           + b1p.size * 4 + b2p.size * 4 + m_p * dim_p * 4),
    )

    # ---- Weight-resident fast path --------------------------------------
    # Budget counts double-buffered allocations (Pallas allocates 2 buffers even
    # for constant-index specs) plus the f32/bf16 hidden intermediate.
    resident_bytes = (
        2 * block_m * dim_p * x_itemsize    # x tiles (native dtype)
        + 2 * dim_p * hidden_p * 2          # W1 (bf16)
        + 2 * hidden_p * dim_p * 2          # W2 (bf16)
        + 2 * 8 * hidden_p * 4              # b1 (sublane-padded)
        + 2 * 8 * dim_p * 4                 # b2
        + 2 * block_m * dim_p * 4           # out tiles (f32)
        + block_m * dim_p * 2               # x bf16 cast copy
        + block_m * hidden_p * (4 + 2)      # hidden intermediate f32 + bf16 copy
    )

    if resident_bytes <= _RESIDENT_VMEM_BUDGET:
        vmem_limit = int(min(max(int(resident_bytes * 1.3), 16 * _MIB), _VMEM_LIMIT_CAP))
        out2d = pl.pallas_call(
            functools.partial(_ffn_resident_kernel, approx_gelu=approx_gelu),
            out_shape=jax.ShapeDtypeStruct((m_p, dim_p), jnp.float32),
            grid_spec=pltpu.PrefetchScalarGridSpec(
                num_scalar_prefetch=0,
                grid=(num_m_tiles,),
                in_specs=[
                    pl.BlockSpec((block_m, dim_p), lambda i: (i, 0)),     # x rows
                    pl.BlockSpec((dim_p, hidden_p), lambda i: (0, 0)),    # W1 (resident)
                    pl.BlockSpec((1, hidden_p), lambda i: (0, 0)),        # b1 (resident)
                    pl.BlockSpec((hidden_p, dim_p), lambda i: (0, 0)),    # W2 (resident)
                    pl.BlockSpec((1, dim_p), lambda i: (0, 0)),           # b2 (resident)
                ],
                out_specs=pl.BlockSpec((block_m, dim_p), lambda i: (i, 0)),
            ),
            compiler_params=pltpu.CompilerParams(
                dimension_semantics=("parallel",),
                vmem_limit_bytes=vmem_limit,
            ),
            cost_estimate=cost,
        )(x2d, w1p, b1p, w2p, b2p)
        return out2d[:m, :dim].reshape(batch, seq, dim)

    # ---- Streamed-hidden fallback path -----------------------------------
    # block_h: multiple of 128 that exactly divides hidden_p (no FLOP inflation).
    bh = min(block_h, hidden_p)
    bh = max(128, (bh // 128) * 128)
    while hidden_p % bh != 0:
        bh -= 128

    streamed_bytes = (
        2 * block_m * dim_p * x_itemsize    # x tiles
        + 2 * dim_p * bh * 2                # W1 chunk
        + 2 * bh * dim_p * 2                # W2 chunk
        + 2 * 8 * hidden_p * 4              # full b1 (resident)
        + 2 * 8 * dim_p * 4                 # b2
        + 2 * block_m * dim_p * 4           # out tiles (f32, also the accumulator)
        + block_m * dim_p * 2               # x bf16 cast copy
        + block_m * bh * (4 + 2)            # hidden chunk f32 + bf16 copy
    )
    vmem_limit = int(min(max(int(streamed_bytes * 1.3), 16 * _MIB), _VMEM_LIMIT_CAP))

    out2d = pl.pallas_call(
        functools.partial(_ffn_streamed_kernel, block_h=bh, approx_gelu=approx_gelu),
        out_shape=jax.ShapeDtypeStruct((m_p, dim_p), jnp.float32),
        grid_spec=pltpu.PrefetchScalarGridSpec(
            num_scalar_prefetch=0,
            grid=(num_m_tiles, hidden_p // bh),
            in_specs=[
                pl.BlockSpec((block_m, dim_p), lambda i, k: (i, 0)),   # x rows
                pl.BlockSpec((dim_p, bh), lambda i, k: (0, k)),        # W1 chunk
                pl.BlockSpec((1, hidden_p), lambda i, k: (0, 0)),      # full b1
                pl.BlockSpec((bh, dim_p), lambda i, k: (k, 0)),        # W2 chunk
                pl.BlockSpec((1, dim_p), lambda i, k: (0, 0)),         # b2
            ],
            out_specs=pl.BlockSpec((block_m, dim_p), lambda i, k: (i, 0)),
        ),
        compiler_params=pltpu.CompilerParams(
            dimension_semantics=("parallel", "arbitrary"),
            vmem_limit_bytes=vmem_limit,
        ),
        cost_estimate=cost,
    )(x2d, w1p, b1p, w2p, b2p)

    return out2d[:m, :dim].reshape(batch, seq, dim)


def init_params(key, dim, hidden_dim, dtype=jnp.float32):
    """Deterministic init mimicking nn.Linear (uniform +/- 1/sqrt(fan_in))."""
    k1, k2, k3, k4 = jax.random.split(key, 4)
    bound1 = 1.0 / math.sqrt(dim)
    bound2 = 1.0 / math.sqrt(hidden_dim)
    w1 = jax.random.uniform(k1, (dim, hidden_dim), dtype, -bound1, bound1)
    b1 = jax.random.uniform(k2, (hidden_dim,), dtype, -bound1, bound1)
    w2 = jax.random.uniform(k3, (hidden_dim, dim), dtype, -bound2, bound2)
    b2 = jax.random.uniform(k4, (dim,), dtype, -bound2, bound2)
    return w1, b1, w2, b2


if __name__ == "__main__":
    batch, seq, dim, hidden_dim = 2, 8, 32, 64

    key = jax.random.PRNGKey(0)
    kx, kp = jax.random.split(key)
    x = jax.random.normal(kx, (batch, seq, dim), jnp.float32)
    w1, b1, w2, b2 = init_params(kp, dim, hidden_dim)

    # Pad/cast the weights once, outside the per-call path.
    params = prepare_params(w1, b1, w2, b2)

    out = feed_forward(x, params)
    out = jax.block_until_ready(out)

    # Pure-JAX f32 reference (exact GELU, dropout=0 no-op).  Kernel runs the
    # matmuls in bf16 with f32 accumulation -> loose tolerance vs f32 reference.
    h_ref = x @ w1 + b1
    h_ref = 0.5 * h_ref * (1.0 + jax.lax.erf(h_ref / jnp.sqrt(2.0)))
    ref = h_ref @ w2 + b2
    assert out.shape == ref.shape
    assert jnp.allclose(out, ref, atol=5e-2, rtol=5e-2), "mismatch vs reference"

    print("KERNEL_OK")
</pallas_src>

<mosaic_0001>
module attributes {stable_mosaic.version = 11 : i64} {
  func.func @_ffn_resident_kernel(%arg0: i32, %arg1: memref<16x128xf32, #tpu.memory_space<vmem>>, %arg2: memref<128x128xbf16, #tpu.memory_space<vmem>>, %arg3: memref<1x128xf32, #tpu.memory_space<vmem>>, %arg4: memref<128x128xbf16, #tpu.memory_space<vmem>>, %arg5: memref<1x128xf32, #tpu.memory_space<vmem>>, %arg6: memref<16x128xf32, #tpu.memory_space<vmem>>) attributes {dimension_semantics = [#tpu.dimension_semantics<parallel>], iteration_bounds = array<i64: 1>, scalar_prefetch = 0 : i64, scratch_operands = 0 : i64, tpu.core_type = #tpu.core_type<tc>, window_params = [{transform_indices = @transform_0, window_bounds = array<i64: 16, 128>}, {pipeline_mode = #tpu.pipeline_mode<synchronous>, transform_indices = @transform_1, window_bounds = array<i64: 128, 128>}, {pipeline_mode = #tpu.pipeline_mode<synchronous>, transform_indices = @transform_2, window_bounds = array<i64: 1, 128>}, {pipeline_mode = #tpu.pipeline_mode<synchronous>, transform_indices = @transform_3, window_bounds = array<i64: 128, 128>}, {pipeline_mode = #tpu.pipeline_mode<synchronous>, transform_indices = @transform_4, window_bounds = array<i64: 1, 128>}, {transform_indices = @transform_5, window_bounds = array<i64: 16, 128>}]} {
    %c0 = arith.constant 0 : index
    %c0_0 = arith.constant 0 : index
    %0 = vector.load %arg1[%c0, %c0_0] : memref<16x128xf32, #tpu.memory_space<vmem>>, vector<16x128xf32>
    %1 = arith.truncf %0 : vector<16x128xf32> to vector<16x128xbf16>
    %c0_1 = arith.constant 0 : index
    %c0_2 = arith.constant 0 : index
    %2 = vector.load %arg2[%c0_1, %c0_2] : memref<128x128xbf16, #tpu.memory_space<vmem>>, vector<128x128xbf16>
    %cst = arith.constant dense<0.000000e+00> : vector<16x128xf32>
    %3 = tpu.matmul %1, %2, %cst {dimension_numbers = #tpu.dot_dimension_numbers<[1], [0], [0], [1], [0, 0, 1, 1], [], []>} : vector<16x128xbf16>, vector<128x128xbf16>, vector<16x128xf32> -> vector<16x128xf32>
    %c0_3 = arith.constant 0 : index
    %c0_4 = arith.constant 0 : index
    %4 = vector.load %arg3[%c0_3, %c0_4] : memref<1x128xf32, #tpu.memory_space<vmem>>, vector<1x128xf32>
    %5 = vector.broadcast %4 : vector<1x128xf32> to vector<16x128xf32>
    %6 = arith.addf %3, %5 : vector<16x128xf32>
    %cst_5 = arith.constant 5.000000e-01 : f32
    %7 = vector.broadcast %cst_5 : f32 to vector<16x128xf32>
    %8 = arith.mulf %7, %6 : vector<16x128xf32>
    %cst_6 = arith.constant 0.707106769 : f32
    %9 = vector.broadcast %cst_6 : f32 to vector<16x128xf32>
    %10 = arith.mulf %6, %9 : vector<16x128xf32>
    %11 = math.erf %10 : vector<16x128xf32>
    %cst_7 = arith.constant 1.000000e+00 : f32
    %12 = vector.broadcast %cst_7 : f32 to vector<16x128xf32>
    %13 = arith.addf %12, %11 : vector<16x128xf32>
    %14 = arith.mulf %8, %13 : vector<16x128xf32>
    %15 = arith.truncf %14 : vector<16x128xf32> to vector<16x128xbf16>
    %c0_8 = arith.constant 0 : index
    %c0_9 = arith.constant 0 : index
    %16 = vector.load %arg4[%c0_8, %c0_9] : memref<128x128xbf16, #tpu.memory_space<vmem>>, vector<128x128xbf16>
    %cst_10 = arith.constant dense<0.000000e+00> : vector<16x128xf32>
    %17 = tpu.matmul %15, %16, %cst_10 {dimension_numbers = #tpu.dot_dimension_numbers<[1], [0], [0], [1], [0, 0, 1, 1], [], []>} : vector<16x128xbf16>, vector<128x128xbf16>, vector<16x128xf32> -> vector<16x128xf32>
    %c0_11 = arith.constant 0 : index
    %c0_12 = arith.constant 0 : index
    %18 = vector.load %arg5[%c0_11, %c0_12] : memref<1x128xf32, #tpu.memory_space<vmem>>, vector<1x128xf32>
    %19 = vector.broadcast %18 : vector<1x128xf32> to vector<16x128xf32>
    %20 = arith.addf %17, %19 : vector<16x128xf32>
    %c0_13 = arith.constant 0 : index
    %c0_14 = arith.constant 0 : index
    %21 = vector.load %arg6[%c0_13, %c0_14] : memref<16x128xf32, #tpu.memory_space<vmem>>, vector<16x128xf32>
    tpu.vector_store %arg6[%c0_13, %c0_14], %20 {strides = array<i32>} : memref<16x128xf32, #tpu.memory_space<vmem>>, vector<16x128xf32>,
    return
  }
  func.func @transform_0(%arg0: i32) -> (i32, i32) {
    %c0_i32 = arith.constant 0 : i32
    %c0_i32_0 = arith.constant 0 : i32
    return %arg0, %c0_i32 : i32, i32
  }
  func.func @transform_1(%arg0: i32) -> (i32, i32) {
    %c0_i32 = arith.constant 0 : i32
    %c0_i32_0 = arith.constant 0 : i32
    %c0_i32_1 = arith.constant 0 : i32
    return %c0_i32, %c0_i32_0 : i32, i32
  }
  func.func @transform_2(%arg0: i32) -> (i32, i32) {
    %c0_i32 = arith.constant 0 : i32
    %c0_i32_0 = arith.constant 0 : i32
    %c0_i32_1 = arith.constant 0 : i32
    return %c0_i32, %c0_i32_0 : i32, i32
  }
  func.func @transform_3(%arg0: i32) -> (i32, i32) {
    %c0_i32 = arith.constant 0 : i32
    %c0_i32_0 = arith.constant 0 : i32
    %c0_i32_1 = arith.constant 0 : i32
    return %c0_i32, %c0_i32_0 : i32, i32
  }
  func.func @transform_4(%arg0: i32) -> (i32, i32) {
    %c0_i32 = arith.constant 0 : i32
    %c0_i32_0 = arith.constant 0 : i32
    %c0_i32_1 = arith.constant 0 : i32
    return %c0_i32, %c0_i32_0 : i32, i32
  }
  func.func @transform_5(%arg0: i32) -> (i32, i32) {
    %c0_i32 = arith.constant 0 : i32
    %c0_i32_0 = arith.constant 0 : i32
    return %arg0, %c0_i32 : i32, i32
  }
}

</mosaic_0001>

<llo_original>
// kernel: tpu_custom_call.1
$region0: #{tpu_custom_call.1}
  #allocation0 [shape = 'u32[]', space=smem, size = 0x4, offset = 0x4, fixed_abs, tag = 'smem constant byte address 0x4 - core index']
  #allocation1 [shape = 'u32[144,128]{1,0:T(1,128)}', space=vmem, size = 0x12000, scoped, tag = 'internal scratch']
  %s0 = inlined_call_operand.hbm [shape: f32[16,128], index: 0, kind: input, shape index: {}]
  %s1 = inlined_call_operand.hbm [shape: bf16[128,128], index: 1, kind: input, shape index: {}]
  %s2 = inlined_call_operand.vmem [shape: f32[1,128], index: 2, kind: input, shape index: {}]
  %s3 = inlined_call_operand.hbm [shape: bf16[128,128], index: 3, kind: input, shape index: {}]
  %s4 = inlined_call_operand.vmem [shape: f32[1,128], index: 4, kind: input, shape index: {}]
  %s5 = inlined_call_operand.hbm [shape: f32[16,128], index: 5, kind: output, shape index: {}]
  %s6 = sld [smem:[#allocation0]]
  $region42: #{tpu_custom_call.1} parent=0
    _
  %s8 = ssub.s32 1, %s6
  %s9 = scalar_select 0, %s8, %s6
  $region1: #{tpu_custom_call.1} parent=0
    #allocation2 [shape = 'u8[8192]{0}', space=vmem, size = 0x2000, scoped, tag = 'input window, operand 0, single buffered']
    #allocation3 [shape = 's32[1]{0}', space=sflag, size = 0x4, scoped, tag = 'scoped memory for tpu_custom_call.1']
    #allocation4 [shape = 's32[1]{0}', space=sflag, size = 0x4, scoped, tag = 'scoped memory for tpu_custom_call.1']
    #allocation5 [shape = 'u8[32768]{0}', space=vmem, size = 0x8000, scoped, tag = 'input window, operand 1, single buffered']
    #allocation6 [shape = 's32[1]{0}', space=sflag, size = 0x4, scoped, tag = 'scoped memory for tpu_custom_call.1']
    #allocation7 [shape = 'u8[32768]{0}', space=vmem, size = 0x8000, scoped, tag = 'input window, operand 3, single buffered']
    #allocation8 [shape = 'u8[8192]{0}', space=vmem, size = 0x2000, scoped, tag = 'output window, operand 0, single buffered']
    %10 = vsyncpa [#allocation3], 0
    %11 = vsyncpa [#allocation6], 0
    %12 = vsyncpa [#allocation4], 0
    // Predicated region
    $region2: #{tpu_custom_call.1} parent=1 // pred_check
      _
    $region3: #{tpu_custom_call.1} parent=1 // pred_check_branch
      %14 = sbr.rel (0) target = $region5
    $region4: #{tpu_custom_call.1} parent=1 // pred_region
      %s16 = ssub.s32 256, 256
      %17 = vsyncadd [#allocation3], %s16
      %s18 = sshll.u32 [#allocation2], 4
      %s19 = int_to_ptr.vmem [resolvable:$true] %s18
      %24 = dma.hbm_to_vmem [thread:$0]  %s0, 256, %s19, [#allocation3], 128, 128, 8
    $region5: #{tpu_custom_call.1} parent=1 // pred_fallthru
      _
    // Predicated region
    $region6: #{tpu_custom_call.1} parent=1 // pred_check
      _
    $region7: #{tpu_custom_call.1} parent=1 // pred_check_branch
      %26 = sbr.rel (0) target = $region9
    $region8: #{tpu_custom_call.1} parent=1 // pred_region
      %s28 = ssub.s32 1024, 1024
      %29 = vsyncadd [#allocation6], %s28
      %s30 = sshll.u32 [#allocation5], 4
      %s31 = int_to_ptr.vmem [resolvable:$true] %s30
      %36 = dma.hbm_to_vmem [thread:$0]  %s1, 1024, %s31, [#allocation6], 64, 64, 4
    $region9: #{tpu_custom_call.1} parent=1 // pred_fallthru
      _
    // Predicated region
    $region10: #{tpu_custom_call.1} parent=1 // pred_check
      _
    $region11: #{tpu_custom_call.1} parent=1 // pred_check_branch
      %38 = sbr.rel (0) target = $region13
    $region12: #{tpu_custom_call.1} parent=1 // pred_region
      _
    $region13: #{tpu_custom_call.1} parent=1 // pred_fallthru
      _
    // Predicated region
    $region14: #{tpu_custom_call.1} parent=1 // pred_check
      _
    $region15: #{tpu_custom_call.1} parent=1 // pred_check_branch
      %40 = sbr.rel (0) target = $region17
    $region16: #{tpu_custom_call.1} parent=1 // pred_region
      %s42 = ssub.s32 1024, 1024
      %43 = vsyncadd [#allocation6], %s42
      %s44 = sshll.u32 [#allocation7], 4
      %s45 = int_to_ptr.vmem [resolvable:$true] %s44
      %50 = dma.hbm_to_vmem [thread:$0]  %s3, 1024, %s45, [#allocation6], 64, 64, 4
    $region17: #{tpu_custom_call.1} parent=1 // pred_fallthru
      _
    // Predicated region
    $region18: #{tpu_custom_call.1} parent=1 // pred_check
      _
    $region19: #{tpu_custom_call.1} parent=1 // pred_check_branch
      %52 = sbr.rel (0) target = $region21
    $region20: #{tpu_custom_call.1} parent=1 // pred_region
      _
    $region21: #{tpu_custom_call.1} parent=1 // pred_fallthru
      _
    // Predicated region
    $region22: #{tpu_custom_call.1} parent=1 // pred_check
      _
    $region23: #{tpu_custom_call.1} parent=1 // pred_check_branch
      %54 = sbr.rel (0) target = $region25
    $region24: #{tpu_custom_call.1} parent=1 // pred_region
      %55 = dma.done [#allocation3], 256
    $region25: #{tpu_custom_call.1} parent=1 // pred_fallthru
      _
    // Predicated region
    $region26: #{tpu_custom_call.1} parent=1 // pred_check
      _
    $region27: #{tpu_custom_call.1} parent=1 // pred_check_branch
      %57 = sbr.rel (0) target = $region29
    $region28: #{tpu_custom_call.1} parent=1 // pred_region
      %58 = dma.done [#allocation6], 1024
    $region29: #{tpu_custom_call.1} parent=1 // pred_fallthru
      _
    // Predicated region
    $region30: #{tpu_custom_call.1} parent=1 // pred_check
      _
    $region31: #{tpu_custom_call.1} parent=1 // pred_check_branch
      %60 = sbr.rel (0) target = $region33
    $region32: #{tpu_custom_call.1} parent=1 // pred_region
      %61 = dma.done [#allocation6], 1024
    $region33: #{tpu_custom_call.1} parent=1 // pred_fallthru
      _
    %v63 = vld [vmem:[#allocation2] sm:$0xff]
    %v64 = vld [vmem:[#allocation2 + $0x8] sm:$0xff]
    %v65 = vpack.c.bf16 %v64, %v63
    %v66 = vld [vmem:[#allocation5] sm:$0xf]
    %v67 = vld [vmem:[#allocation5 + $0x4] sm:$0xf]
    %v68 = vld [vmem:[#allocation5 + $0x8] sm:$0xf]
    %v69 = vld [vmem:[#allocation5 + $0xc] sm:$0xf]
    %v70 = vld [vmem:[#allocation5 + $0x10] sm:$0xf]
    %v71 = vld [vmem:[#allocation5 + $0x14] sm:$0xf]
    %v72 = vld [vmem:[#allocation5 + $0x18] sm:$0xf]
    %v73 = vld [vmem:[#allocation5 + $0x1c] sm:$0xf]
    %v74 = vld [vmem:[#allocation5 + $0x20] sm:$0xf]
    %v75 = vld [vmem:[#allocation5 + $0x24] sm:$0xf]
    %v76 = vld [vmem:[#allocation5 + $0x28] sm:$0xf]
    %v77 = vld [vmem:[#allocation5 + $0x2c] sm:$0xf]
    %v78 = vld [vmem:[#allocation5 + $0x30] sm:$0xf]
    %v79 = vld [vmem:[#allocation5 + $0x34] sm:$0xf]
    %v80 = vld [vmem:[#allocation5 + $0x38] sm:$0xf]
    %v81 = vld [vmem:[#allocation5 + $0x3c] sm:$0xf]
    %v82 = vld [vmem:[%s2] sm:$0x1]
    %v84 = vlaneseq
    %v85 = vshrl.u32 %v84, 7
    %v86 = vsub.s32 0, %v85
    %v87 = vrot.slane %v82, %v86
    %v105 = vunpack.c.l.b16 %v66
    %v106 = vunpack.c.l.b16 %v67
    %v107 = vunpack.c.l.b16 %v68
    %v108 = vunpack.c.l.b16 %v69
    %v109 = vunpack.c.l.b16 %v70
    %v110 = vunpack.c.l.b16 %v71
    %v111 = vunpack.c.l.b16 %v72
    %v112 = vunpack.c.l.b16 %v73
    %v113 = vunpack.c.l.b16 %v74
    %v114 = vunpack.c.l.b16 %v75
    %v115 = vunpack.c.l.b16 %v76
    %v116 = vunpack.c.l.b16 %v77
    %v117 = vunpack.c.l.b16 %v78
    %v118 = vunpack.c.l.b16 %v79
    %v119 = vunpack.c.l.b16 %v80
    %v120 = vunpack.c.l.b16 %v81
    %v121 = vpack.c.b16 %v106, %v105
    %v122 = vpack.c.b16 %v108, %v107
    %v123 = vpack.c.b16 %v110, %v109
    %v124 = vpack.c.b16 %v112, %v111
    %v125 = vpack.c.b16 %v114, %v113
    %v126 = vpack.c.b16 %v116, %v115
    %v127 = vpack.c.b16 %v118, %v117
    %v128 = vpack.c.b16 %v120, %v119
    %137 = vmatprep.subr.bf16.mxu0 0
    %138 = vmatpush1.bf16.msra.mxu0 %v121
    %139 = vmatprep.subr.bf16.mxu0 0
    %140 = vmatpush1.bf16.msra.mxu0 %v122
    %141 = vmatprep.subr.bf16.mxu0 0
    %142 = vmatpush1.bf16.msra.mxu0 %v123
    %143 = vmatprep.subr.bf16.mxu0 0
    %144 = vmatpush1.bf16.msra.mxu0 %v124
    %145 = vmatprep.subr.bf16.mxu0 0
    %146 = vmatpush1.bf16.msra.mxu0 %v125
    %147 = vmatprep.subr.bf16.mxu0 0
    %148 = vmatpush1.bf16.msra.mxu0 %v126
    %149 = vmatprep.subr.bf16.mxu0 0
    %150 = vmatpush1.bf16.msra.mxu0 %v127
    %151 = vmatprep.subr.bf16.mxu0 0
    %152 = vmatpush1.bf16.msra.mxu0 %v128
    %153 = vmatprep.subr.bf16.mxu0 0
    %154 = vmatpush1.bf16.msra.mxu0 0
    %155 = vmatprep.subr.bf16.mxu0 0
    %156 = vmatpush1.bf16.msra.mxu0 0
    %157 = vmatprep.subr.bf16.mxu0 0
    %158 = vmatpush1.bf16.msra.mxu0 0
    %159 = vmatprep.subr.bf16.mxu0 0
    %160 = vmatpush1.bf16.msra.mxu0 0
    %161 = vmatprep.subr.bf16.mxu0 0
    %162 = vmatpush1.bf16.msra.mxu0 0
    %163 = vmatprep.subr.bf16.mxu0 0
    %164 = vmatpush1.bf16.msra.mxu0 0
    %165 = vmatprep.subr.bf16.mxu0 0
    %166 = vmatpush1.bf16.msra.mxu0 0
    %167 = vmatprep.subr.bf16.mxu0 0
    %168 = vmatpush1.bf16.msra.mxu0 0
    %169 = vmatprep.mubr.bf16.mxu0 0
    %170 = vmatmul.mubr.bf16.gmra.mrb[0].mxu0 %v65
    %v171 = vpop.f32.mrb[0].mxu0
    %v172 = vadd.f32 %v87, %v171
    %v173 = vpop.f32.mrb[0].mxu0
    %v174 = vpop.f32.mrb[0].mxu0
    %v175 = vadd.f32 %v87, %v174
    %v176 = vpop.f32.mrb[0].mxu0
    %177 = vdwg.mxu0
    %v178 = vmul.f32 %v172, 0.5
    %v179 = vmul.f32 %v175, 0.5
    %v180 = vmul.f32 %v172, 0.70710677
    %v181 = vmul.f32 %v175, 0.70710677
    %v182 = verf.f32.pop %v180
    %v183 = verf.f32.pop %v181
    %v184 = vadd.f32 %v182, 1.0
    %v185 = vadd.f32 %v183, 1.0
    %v186 = vmul.f32 %v178, %v184
    %v187 = vmul.f32 %v179, %v185
    %v188 = vpack.c.bf16 %v187, %v186
    %v189 = vld [vmem:[#allocation7] sm:$0xf]
    %v190 = vld [vmem:[#allocation7 + $0x4] sm:$0xf]
    %v191 = vld [vmem:[#allocation7 + $0x8] sm:$0xf]
    %v192 = vld [vmem:[#allocation7 + $0xc] sm:$0xf]
    %v193 = vld [vmem:[#allocation7 + $0x10] sm:$0xf]
    %v194 = vld [vmem:[#allocation7 + $0x14] sm:$0xf]
    %v195 = vld [vmem:[#allocation7 + $0x18] sm:$0xf]
    %v196 = vld [vmem:[#allocation7 + $0x1c] sm:$0xf]
    %v197 = vld [vmem:[#allocation7 + $0x20] sm:$0xf]
    %v198 = vld [vmem:[#allocation7 + $0x24] sm:$0xf]
    %v199 = vld [vmem:[#allocation7 + $0x28] sm:$0xf]
    %v200 = vld [vmem:[#allocation7 + $0x2c] sm:$0xf]
    %v201 = vld [vmem:[#allocation7 + $0x30] sm:$0xf]
    %v202 = vld [vmem:[#allocation7 + $0x34] sm:$0xf]
    %v203 = vld [vmem:[#allocation7 + $0x38] sm:$0xf]
    %v204 = vld [vmem:[#allocation7 + $0x3c] sm:$0xf]
    %v205 = vld [vmem:[%s4] sm:$0x1]
    %v207 = vlaneseq
    %v208 = vshrl.u32 %v207, 7
    %v209 = vsub.s32 0, %v208
    %v210 = vrot.slane %v205, %v209
    %v228 = vunpack.c.l.b16 %v189
    %v229 = vunpack.c.l.b16 %v190
    %v230 = vunpack.c.l.b16 %v191
    %v231 = vunpack.c.l.b16 %v192
    %v232 = vunpack.c.l.b16 %v193
    %v233 = vunpack.c.l.b16 %v194
    %v234 = vunpack.c.l.b16 %v195
    %v235 = vunpack.c.l.b16 %v196
    %v236 = vunpack.c.l.b16 %v197
    %v237 = vunpack.c.l.b16 %v198
    %v238 = vunpack.c.l.b16 %v199
    %v239 = vunpack.c.l.b16 %v200
    %v240 = vunpack.c.l.b16 %v201
    %v241 = vunpack.c.l.b16 %v202
    %v242 = vunpack.c.l.b16 %v203
    %v243 = vunpack.c.l.b16 %v204
    %v244 = vpack.c.b16 %v229, %v228
    %v245 = vpack.c.b16 %v231, %v230
    %v246 = vpack.c.b16 %v233, %v232
    %v247 = vpack.c.b16 %v235, %v234
    %v248 = vpack.c.b16 %v237, %v236
    %v249 = vpack.c.b16 %v239, %v238
    %v250 = vpack.c.b16 %v241, %v240
    %v251 = vpack.c.b16 %v243, %v242
    %260 = vmatprep.subr.bf16.mxu0 0
    %261 = vmatpush1.bf16.msra.mxu0 %v244
    %262 = vmatprep.subr.bf16.mxu0 0
    %263 = vmatpush1.bf16.msra.mxu0 %v245
    %264 = vmatprep.subr.bf16.mxu0 0
    %265 = vmatpush1.bf16.msra.mxu0 %v246
    %266 = vmatprep.subr.bf16.mxu0 0
    %267 = vmatpush1.bf16.msra.mxu0 %v247
    %268 = vmatprep.subr.bf16.mxu0 0
    %269 = vmatpush1.bf16.msra.mxu0 %v248
    %270 = vmatprep.subr.bf16.mxu0 0
    %271 = vmatpush1.bf16.msra.mxu0 %v249
    %272 = vmatprep.subr.bf16.mxu0 0
    %273 = vmatpush1.bf16.msra.mxu0 %v250
    %274 = vmatprep.subr.bf16.mxu0 0
    %275 = vmatpush1.bf16.msra.mxu0 %v251
    %276 = vmatprep.subr.bf16.mxu0 0
    %277 = vmatpush1.bf16.msra.mxu0 0
    %278 = vmatprep.subr.bf16.mxu0 0
    %279 = vmatpush1.bf16.msra.mxu0 0
    %280 = vmatprep.subr.bf16.mxu0 0
    %281 = vmatpush1.bf16.msra.mxu0 0
    %282 = vmatprep.subr.bf16.mxu0 0
    %283 = vmatpush1.bf16.msra.mxu0 0
    %284 = vmatprep.subr.bf16.mxu0 0
    %285 = vmatpush1.bf16.msra.mxu0 0
    %286 = vmatprep.subr.bf16.mxu0 0
    %287 = vmatpush1.bf16.msra.mxu0 0
    %288 = vmatprep.subr.bf16.mxu0 0
    %289 = vmatpush1.bf16.msra.mxu0 0
    %290 = vmatprep.subr.bf16.mxu0 0
    %291 = vmatpush1.bf16.msra.mxu0 0
    %292 = vmatprep.mubr.bf16.mxu0 0
    %293 = vmatmul.mubr.bf16.gmra.mrb[0].mxu0 %v188
    %v294 = vpop.f32.mrb[0].mxu0
    %v295 = vadd.f32 %v210, %v294
    %v296 = vpop.f32.mrb[0].mxu0
    %v297 = vpop.f32.mrb[0].mxu0
    %v298 = vadd.f32 %v210, %v297
    %v299 = vpop.f32.mrb[0].mxu0
    %300 = vdwg.mxu0
    %301 = vst [vmem:[#allocation8] sm:$0xff] %v295
    %302 = vst [vmem:[#allocation8 + $0x8] sm:$0xff] %v298
    // Predicated region
    $region34: #{tpu_custom_call.1} parent=1 // pred_check
      _
    $region35: #{tpu_custom_call.1} parent=1 // pred_check_branch
      %304 = sbr.rel (0) target = $region37
    $region36: #{tpu_custom_call.1} parent=1 // pred_region
      %s306 = ssub.s32 256, 256
      %307 = vsyncadd [#allocation4], %s306
      %s308 = sshll.u32 [#allocation8], 4
      %s309 = int_to_ptr.vmem [resolvable:$true] %s308
      %314 = dma.vmem_to_hbm [thread:$0]  %s309, 256, %s5, [#allocation4], 128, 128, 8
    $region37: #{tpu_custom_call.1} parent=1 // pred_fallthru
      _
    // Predicated region
    $region38: #{tpu_custom_call.1} parent=1 // pred_check
      _
    $region39: #{tpu_custom_call.1} parent=1 // pred_check_branch
      %316 = sbr.rel (0) target = $region41
    $region40: #{tpu_custom_call.1} parent=1 // pred_region
      %317 = dma.done [#allocation4], 256
    $region41: #{tpu_custom_call.1} parent=1 // pred_fallthru
      _
    %318 = vsyncpa [#allocation3], 1
    %319 = vsyncpa [#allocation6], 1
    %320 = vsyncpa [#allocation4], 1

</llo_original>
